<compile_context>
chip_gen: v5e
topology: v5e:2x2
jax: 0.10.0
libtpu: 0.0.40
codegen_flags: <defaults>
</compile_context>

<pallas_src>
import functools
import math

import jax
import jax.numpy as jnp
from jax.experimental import pallas as pl
from jax.experimental.pallas import tpu as pltpu


def _flash_attn_kernel(q_ref, k_ref, v_ref, o_ref, m_sc, l_sc, acc_sc, *,
                       mxu_dtype):
    kv_idx = pl.program_id(2)

    @pl.when(kv_idx == 0)
    def _init():
        m_sc[...] = jnp.full_like(m_sc, -jnp.inf)
        l_sc[...] = jnp.zeros_like(l_sc)
        acc_sc[...] = jnp.zeros_like(acc_sc)

    d = q_ref.shape[-1]
    # Fold 1/sqrt(d) AND log2(e) into q (only S*D elements) so both exps below
    # are bare exp2 — no extra VALU pass over the (Hb, Tq, Tk) score tile.
    scale = jnp.float32((1.0 / math.sqrt(d)) * math.log2(math.e))

    q = (q_ref[...].astype(jnp.float32) * scale).astype(mxu_dtype)  # (Hb,Tq,D)
    k = k_ref[...].astype(mxu_dtype)                                # (Hb,Tk,D)
    v = v_ref[...].astype(mxu_dtype)                                # (Hb,Tk,D)

    # q @ k^T per fused head, contracting the last dims (no XLU transpose),
    # f32 accumulation on the MXU.
    s = jnp.einsum("gqd,gkd->gqk", q, k,
                   preferred_element_type=jnp.float32)    # (Hb, Tq, Tk) f32

    # Online (streaming) softmax in the base-2 domain; stats kept in f32.
    m_prev = m_sc[...]
    m_new = jnp.maximum(m_prev, s.max(axis=-1, keepdims=True))
    alpha = jnp.exp2(m_prev - m_new)
    p = jnp.exp2(s - m_new)
    l_sc[...] = alpha * l_sc[...] + p.sum(axis=-1, keepdims=True)
    acc_sc[...] = alpha * acc_sc[...] + jnp.einsum(
        "gqk,gkd->gqd", p.astype(mxu_dtype), v,
        preferred_element_type=jnp.float32)
    m_sc[...] = m_new

    @pl.when(kv_idx == pl.num_programs(2) - 1)
    def _finalize():
        # Exact reciprocal: (block_h, tq, 1) elems once per q tile, negligible.
        o_ref[...] = (acc_sc[...] / l_sc[...]).astype(o_ref.dtype)


def _pick_tile(size, target, multiples):
    """Largest tile <= target that divides `size` and is a multiple of one of
    `multiples` (tried in order); falls back to the full extent (which is
    always a legal block shape)."""
    for m in multiples:
        t = min(target, size)
        t -= t % m
        while t >= m:
            if size % t == 0:
                return t
            t -= m
    return size


def _vmem_estimate(block_h, tq, tk, d, itemsize, mxu_itemsize):
    # Double-buffered q/k/v/out blocks + f32 accumulator/stats + score tiles.
    io = 2 * block_h * (2 * tq * d + 2 * tk * d) * itemsize
    acc = block_h * tq * d * 4 + 2 * block_h * tq * 4
    scores = block_h * tq * tk * (4 + 4 + mxu_itemsize)   # s, p(f32), p(mxu)
    return io + acc + scores


def attention(q, k, v, mask=None, *, block_q=512, block_k=512, block_h=None,
              mxu_dtype=jnp.bfloat16,
              vmem_limit_bytes=56 * 1024 * 1024,
              vmem_budget_bytes=40 * 1024 * 1024):
    """Pallas TPU implementation of Model.forward(q, k, v, mask).

    `mask` is accepted for API parity but ignored — the reference forward
    never applies it. mxu_dtype=None keeps matmul operands in the input dtype.
    """
    del mask  # unused by the reference forward (footgun noted: no masking path)
    B, H, S, D = q.shape
    BH = B * H
    if mxu_dtype is None:
        mxu_dtype = q.dtype

    itemsize = jnp.dtype(q.dtype).itemsize
    mxu_itemsize = jnp.dtype(mxu_dtype).itemsize

    # Free reshape: collapse (B, H) so the leading grid axis is one big
    # parallel axis and heads can be fused per block.
    qr = q.reshape(BH, S, D)
    kr = k.reshape(BH, S, D)
    vr = v.reshape(BH, S, D)

    # (8,128)-legal tiles: tq multiple of 8 (sublane dim of q/o blocks and of
    # the score tile); tk preferably a multiple of 128 (lane dim of the score
    # tile), else 8, else full extent.
    # TODO(synk): for non-divisible / prime-ish S a padded+masked tiling path
    # would avoid falling back to full-extent tiles.
    tq = _pick_tile(S, block_q, (8,))
    tk = _pick_tile(S, block_k, (128, 8))

    # Heads fused per grid step: aim for a fused width of >= 256 lanes' worth
    # of D (>= 2 heads even when D = 128), then enforce divisibility, a VMEM
    # budget, and >= 2 parallel work units (keeps both v7x TCs busy).
    if block_h is None:
        block_h = max(2, pl.cdiv(256, max(D, 1)))
    block_h = max(1, min(block_h, BH))
    while BH % block_h:
        block_h -= 1
    while block_h > 1 and _vmem_estimate(block_h, tq, tk, D, itemsize,
                                         mxu_itemsize) > vmem_budget_bytes:
        block_h -= 1
        while BH % block_h:
            block_h -= 1
    while block_h > 1 and (BH // block_h) * (S // tq) < 2:
        block_h -= 1
        while BH % block_h:
            block_h -= 1

    grid = (BH // block_h, S // tq, S // tk)

    q_spec = pl.BlockSpec((block_h, tq, D), lambda g, qi, ki: (g, qi, 0))
    kv_spec = pl.BlockSpec((block_h, tk, D), lambda g, qi, ki: (g, ki, 0))
    o_spec = pl.BlockSpec((block_h, tq, D), lambda g, qi, ki: (g, qi, 0))
    # TODO(synk): for production D < 128, repack the output lane-dense
    # (fold block_h into the last dim) to avoid masked vst; not done here.

    out = pl.pallas_call(
        functools.partial(_flash_attn_kernel, mxu_dtype=mxu_dtype),
        out_shape=jax.ShapeDtypeStruct((BH, S, D), q.dtype),
        grid_spec=pltpu.PrefetchScalarGridSpec(
            num_scalar_prefetch=0,
            grid=grid,
            in_specs=[q_spec, kv_spec, kv_spec],
            out_specs=o_spec,
            scratch_shapes=[
                pltpu.VMEM((block_h, tq, 1), jnp.float32),   # running max (base-2)
                pltpu.VMEM((block_h, tq, 1), jnp.float32),   # running sum
                pltpu.VMEM((block_h, tq, D), jnp.float32),   # accumulator
            ],
        ),
        compiler_params=pltpu.CompilerParams(
            dimension_semantics=("parallel", "parallel", "arbitrary"),
            vmem_limit_bytes=vmem_limit_bytes,
        ),
    )(qr, kr, vr)
    return out.reshape(B, H, S, D)


def _reference(q, k, v):
    d = q.shape[-1]
    s = jnp.einsum("bhqd,bhkd->bhqk", q, k) / math.sqrt(d)
    p = jax.nn.softmax(s, axis=-1)
    return jnp.einsum("bhqk,bhkd->bhqd", p, v)


if __name__ == "__main__":
    key = jax.random.PRNGKey(0)
    kq, kk, kv = jax.random.split(key, 3)

    B, H, S, D = 2, 4, 8, 32
    q = jax.random.normal(kq, (B, H, S, D), dtype=jnp.float32)
    k = jax.random.normal(kk, (B, H, S, D), dtype=jnp.float32)
    v = jax.random.normal(kv, (B, H, S, D), dtype=jnp.float32)
    mask = jnp.ones((B, H, S, S), dtype=jnp.float32)  # unused, API parity only

    ref = _reference(q, k, v)

    # Fast path: bf16 MXU operands with f32 accumulation.
    out = jax.block_until_ready(attention(q, k, v, mask))
    assert out.shape == (B, H, S, D)
    err_bf16 = float(jnp.max(jnp.abs(out - ref)))
    assert jnp.allclose(out, ref, atol=2e-2, rtol=2e-2), err_bf16

    # Full-precision path (matmul operands kept in the input dtype).
    out_f32 = jax.block_until_ready(attention(q, k, v, mask, mxu_dtype=None))
    err_f32 = float(jnp.max(jnp.abs(out_f32 - ref)))
    assert jnp.allclose(out_f32, ref, atol=1e-4, rtol=1e-4), err_f32

    print("KERNEL_OK")
</pallas_src>

<mosaic_0001>
module attributes {stable_mosaic.version = 11 : i64} {
  func.func @_flash_attn_kernel(%arg0: i32, %arg1: i32, %arg2: i32, %arg3: memref<4x8x32xf32, #tpu.memory_space<vmem>>, %arg4: memref<4x8x32xf32, #tpu.memory_space<vmem>>, %arg5: memref<4x8x32xf32, #tpu.memory_space<vmem>>, %arg6: memref<4x8x32xf32, #tpu.memory_space<vmem>>, %arg7: memref<4x8x1xf32, #tpu.memory_space<vmem>>, %arg8: memref<4x8x1xf32, #tpu.memory_space<vmem>>, %arg9: memref<4x8x32xf32, #tpu.memory_space<vmem>>) attributes {dimension_semantics = [#tpu.dimension_semantics<parallel>, #tpu.dimension_semantics<parallel>, #tpu.dimension_semantics<arbitrary>], iteration_bounds = array<i64: 2, 1, 1>, scalar_prefetch = 0 : i64, scratch_operands = 3 : i64, tpu.core_type = #tpu.core_type<tc>, window_params = [{transform_indices = @transform_0, window_bounds = array<i64: 4, 8, 32>}, {transform_indices = @transform_1, window_bounds = array<i64: 4, 8, 32>}, {transform_indices = @transform_2, window_bounds = array<i64: 4, 8, 32>}, {transform_indices = @transform_3, window_bounds = array<i64: 4, 8, 32>}]} {
    %c0_i32 = arith.constant 0 : i32
    %0 = arith.cmpi eq, %arg2, %c0_i32 : i32
    %1 = arith.extui %0 : i1 to i32
    %c0_i32_0 = arith.constant 0 : i32
    %2 = arith.cmpi ne, %1, %c0_i32_0 : i32
    scf.if %2 {
      %cst_33 = arith.constant 0xFF800000 : f32
      %38 = vector.broadcast %cst_33 : f32 to vector<4x8x1xf32>
      %c0_34 = arith.constant 0 : index
      %c0_35 = arith.constant 0 : index
      %c0_36 = arith.constant 0 : index
      %39 = vector.load %arg7[%c0_34, %c0_35, %c0_36] : memref<4x8x1xf32, #tpu.memory_space<vmem>>, vector<4x8x1xf32>
      tpu.vector_store %arg7[%c0_34, %c0_35, %c0_36], %38 {strides = array<i32>} : memref<4x8x1xf32, #tpu.memory_space<vmem>>, vector<4x8x1xf32>,
      %cst_37 = arith.constant 0.000000e+00 : f32
      %40 = vector.broadcast %cst_37 : f32 to vector<4x8x1xf32>
      %c0_38 = arith.constant 0 : index
      %c0_39 = arith.constant 0 : index
      %c0_40 = arith.constant 0 : index
      %41 = vector.load %arg8[%c0_38, %c0_39, %c0_40] : memref<4x8x1xf32, #tpu.memory_space<vmem>>, vector<4x8x1xf32>
      tpu.vector_store %arg8[%c0_38, %c0_39, %c0_40], %40 {strides = array<i32>} : memref<4x8x1xf32, #tpu.memory_space<vmem>>, vector<4x8x1xf32>,
      %cst_41 = arith.constant 0.000000e+00 : f32
      %42 = vector.broadcast %cst_41 : f32 to vector<4x8x32xf32>
      %c0_42 = arith.constant 0 : index
      %c0_43 = arith.constant 0 : index
      %c0_44 = arith.constant 0 : index
      %43 = vector.load %arg9[%c0_42, %c0_43, %c0_44] : memref<4x8x32xf32, #tpu.memory_space<vmem>>, vector<4x8x32xf32>
      tpu.vector_store %arg9[%c0_42, %c0_43, %c0_44], %42 {strides = array<i32>} : memref<4x8x32xf32, #tpu.memory_space<vmem>>, vector<4x8x32xf32>,
    } else {
    }
    %c0 = arith.constant 0 : index
    %c0_1 = arith.constant 0 : index
    %c0_2 = arith.constant 0 : index
    %3 = vector.load %arg3[%c0, %c0_1, %c0_2] : memref<4x8x32xf32, #tpu.memory_space<vmem>>, vector<4x8x32xf32>
    %cst = arith.constant 0.255034864 : f32
    %4 = vector.broadcast %cst : f32 to vector<4x8x32xf32>
    %5 = arith.mulf %3, %4 : vector<4x8x32xf32>
    %6 = arith.truncf %5 : vector<4x8x32xf32> to vector<4x8x32xbf16>
    %c0_3 = arith.constant 0 : index
    %c0_4 = arith.constant 0 : index
    %c0_5 = arith.constant 0 : index
    %7 = vector.load %arg4[%c0_3, %c0_4, %c0_5] : memref<4x8x32xf32, #tpu.memory_space<vmem>>, vector<4x8x32xf32>
    %8 = arith.truncf %7 : vector<4x8x32xf32> to vector<4x8x32xbf16>
    %c0_6 = arith.constant 0 : index
    %c0_7 = arith.constant 0 : index
    %c0_8 = arith.constant 0 : index
    %9 = vector.load %arg5[%c0_6, %c0_7, %c0_8] : memref<4x8x32xf32, #tpu.memory_space<vmem>>, vector<4x8x32xf32>
    %10 = arith.truncf %9 : vector<4x8x32xf32> to vector<4x8x32xbf16>
    "tpu.trace_start"() <{level = 10 : i32, message = "gqd,gkd->gqk"}> : () -> ()
    %cst_9 = arith.constant dense<0.000000e+00> : vector<4x8x8xf32>
    %11 = tpu.matmul %6, %8, %cst_9 {dimension_numbers = #tpu.dot_dimension_numbers<[2], [2], [1], [1], [0, 0, 0, 1, 1, 1], [0], [0]>} : vector<4x8x32xbf16>, vector<4x8x32xbf16>, vector<4x8x8xf32> -> vector<4x8x8xf32>
    "tpu.trace_stop"() : () -> ()
    %c0_10 = arith.constant 0 : index
    %c0_11 = arith.constant 0 : index
    %c0_12 = arith.constant 0 : index
    %12 = vector.load %arg7[%c0_10, %c0_11, %c0_12] : memref<4x8x1xf32, #tpu.memory_space<vmem>>, vector<4x8x1xf32>
    %cst_13 = arith.constant dense<0xFF800000> : vector<4x8xf32>
    %13 = vector.multi_reduction <maximumf>, %11, %cst_13 [2] : vector<4x8x8xf32> to vector<4x8xf32>
    %14 = vector.shape_cast %13 : vector<4x8xf32> to vector<4x8x1xf32>
    %15 = arith.maximumf %12, %14 : vector<4x8x1xf32>
    %16 = arith.subf %12, %15 : vector<4x8x1xf32>
    %17 = math.exp2 %16 : vector<4x8x1xf32>
    %18 = vector.broadcast %15 : vector<4x8x1xf32> to vector<4x8x8xf32>
    %19 = arith.subf %11, %18 : vector<4x8x8xf32>
    %20 = math.exp2 %19 : vector<4x8x8xf32>
    %c0_14 = arith.constant 0 : index
    %c0_15 = arith.constant 0 : index
    %c0_16 = arith.constant 0 : index
    %21 = vector.load %arg8[%c0_14, %c0_15, %c0_16] : memref<4x8x1xf32, #tpu.memory_space<vmem>>, vector<4x8x1xf32>
    %22 = arith.mulf %17, %21 : vector<4x8x1xf32>
    %cst_17 = arith.constant dense<0.000000e+00> : vector<4x8xf32>
    %23 = vector.multi_reduction <add>, %20, %cst_17 [2] : vector<4x8x8xf32> to vector<4x8xf32>
    %24 = vector.shape_cast %23 : vector<4x8xf32> to vector<4x8x1xf32>
    %25 = arith.addf %22, %24 : vector<4x8x1xf32>
    %c0_18 = arith.constant 0 : index
    %c0_19 = arith.constant 0 : index
    %c0_20 = arith.constant 0 : index
    %26 = vector.load %arg8[%c0_18, %c0_19, %c0_20] : memref<4x8x1xf32, #tpu.memory_space<vmem>>, vector<4x8x1xf32>
    tpu.vector_store %arg8[%c0_18, %c0_19, %c0_20], %25 {strides = array<i32>} : memref<4x8x1xf32, #tpu.memory_space<vmem>>, vector<4x8x1xf32>,
    %c0_21 = arith.constant 0 : index
    %c0_22 = arith.constant 0 : index
    %c0_23 = arith.constant 0 : index
    %27 = vector.load %arg9[%c0_21, %c0_22, %c0_23] : memref<4x8x32xf32, #tpu.memory_space<vmem>>, vector<4x8x32xf32>
    %28 = vector.broadcast %17 : vector<4x8x1xf32> to vector<4x8x32xf32>
    %29 = arith.mulf %28, %27 : vector<4x8x32xf32>
    %30 = arith.truncf %20 : vector<4x8x8xf32> to vector<4x8x8xbf16>
    "tpu.trace_start"() <{level = 10 : i32, message = "gqk,gkd->gqd"}> : () -> ()
    %cst_24 = arith.constant dense<0.000000e+00> : vector<4x8x32xf32>
    %31 = tpu.matmul %30, %10, %cst_24 {dimension_numbers = #tpu.dot_dimension_numbers<[2], [1], [1], [2], [0, 0, 0, 1, 1, 2], [0], [0]>} : vector<4x8x8xbf16>, vector<4x8x32xbf16>, vector<4x8x32xf32> -> vector<4x8x32xf32>
    "tpu.trace_stop"() : () -> ()
    %32 = arith.addf %29, %31 : vector<4x8x32xf32>
    %c0_25 = arith.constant 0 : index
    %c0_26 = arith.constant 0 : index
    %c0_27 = arith.constant 0 : index
    %33 = vector.load %arg9[%c0_25, %c0_26, %c0_27] : memref<4x8x32xf32, #tpu.memory_space<vmem>>, vector<4x8x32xf32>
    tpu.vector_store %arg9[%c0_25, %c0_26, %c0_27], %32 {strides = array<i32>} : memref<4x8x32xf32, #tpu.memory_space<vmem>>, vector<4x8x32xf32>,
    %c0_28 = arith.constant 0 : index
    %c0_29 = arith.constant 0 : index
    %c0_30 = arith.constant 0 : index
    %34 = vector.load %arg7[%c0_28, %c0_29, %c0_30] : memref<4x8x1xf32, #tpu.memory_space<vmem>>, vector<4x8x1xf32>
    tpu.vector_store %arg7[%c0_28, %c0_29, %c0_30], %15 {strides = array<i32>} : memref<4x8x1xf32, #tpu.memory_space<vmem>>, vector<4x8x1xf32>,
    %c0_i32_31 = arith.constant 0 : i32
    %35 = arith.cmpi eq, %arg2, %c0_i32_31 : i32
    %36 = arith.extui %35 : i1 to i32
    %c0_i32_32 = arith.constant 0 : i32
    %37 = arith.cmpi ne, %36, %c0_i32_32 : i32
    scf.if %37 {
      %c0_33 = arith.constant 0 : index
      %c0_34 = arith.constant 0 : index
      %c0_35 = arith.constant 0 : index
      %38 = vector.load %arg9[%c0_33, %c0_34, %c0_35] : memref<4x8x32xf32, #tpu.memory_space<vmem>>, vector<4x8x32xf32>
      %c0_36 = arith.constant 0 : index
      %c0_37 = arith.constant 0 : index
      %c0_38 = arith.constant 0 : index
      %39 = vector.load %arg8[%c0_36, %c0_37, %c0_38] : memref<4x8x1xf32, #tpu.memory_space<vmem>>, vector<4x8x1xf32>
      %40 = vector.broadcast %39 : vector<4x8x1xf32> to vector<4x8x32xf32>
      %41 = arith.divf %38, %40 : vector<4x8x32xf32>
      %c0_39 = arith.constant 0 : index
      %c0_40 = arith.constant 0 : index
      %c0_41 = arith.constant 0 : index
      %42 = vector.load %arg6[%c0_39, %c0_40, %c0_41] : memref<4x8x32xf32, #tpu.memory_space<vmem>>, vector<4x8x32xf32>
      tpu.vector_store %arg6[%c0_39, %c0_40, %c0_41], %41 {strides = array<i32>} : memref<4x8x32xf32, #tpu.memory_space<vmem>>, vector<4x8x32xf32>,
    } else {
    }
    return
  }
  func.func @transform_0(%arg0: i32, %arg1: i32, %arg2: i32) -> (i32, i32, i32) {
    %c0_i32 = arith.constant 0 : i32
    %c0_i32_0 = arith.constant 0 : i32
    return %arg0, %arg1, %c0_i32 : i32, i32, i32
  }
  func.func @transform_1(%arg0: i32, %arg1: i32, %arg2: i32) -> (i32, i32, i32) {
    %c0_i32 = arith.constant 0 : i32
    %c0_i32_0 = arith.constant 0 : i32
    return %arg0, %arg2, %c0_i32 : i32, i32, i32
  }
  func.func @transform_2(%arg0: i32, %arg1: i32, %arg2: i32) -> (i32, i32, i32) {
    %c0_i32 = arith.constant 0 : i32
    %c0_i32_0 = arith.constant 0 : i32
    return %arg0, %arg2, %c0_i32 : i32, i32, i32
  }
  func.func @transform_3(%arg0: i32, %arg1: i32, %arg2: i32) -> (i32, i32, i32) {
    %c0_i32 = arith.constant 0 : i32
    %c0_i32_0 = arith.constant 0 : i32
    return %arg0, %arg1, %c0_i32 : i32, i32, i32
  }
}

</mosaic_0001>

<llo_original>
// kernel: tpu_custom_call.1
$region0: #{tpu_custom_call.1}
  #allocation0 [shape = 'u32[]', space=smem, size = 0x4, offset = 0x4, fixed_abs, tag = 'smem constant byte address 0x4 - core index']
  #allocation1 [shape = 'u32[72,128]{1,0:T(1,128)}', space=vmem, size = 0x9000, scoped, tag = 'internal scratch']
  #allocation2 [shape = 'f32[4,8,1]{2,1,0:T(8,128)}', space=vmem, size = 0x4000, scoped, tag = 'scratch operand']
  #allocation3 [shape = 'f32[4,8,1]{2,1,0:T(8,128)}', space=vmem, size = 0x4000, scoped, tag = 'scratch operand']
  #allocation4 [shape = 'f32[4,8,32]{2,1,0:T(8,128)}', space=vmem, size = 0x4000, scoped, tag = 'scratch operand']
  %s0 = inlined_call_operand.hbm [shape: f32[8,8,32], index: 0, kind: input, shape index: {}]
  %s1 = inlined_call_operand.hbm [shape: f32[8,8,32], index: 1, kind: input, shape index: {}]
  %s2 = inlined_call_operand.hbm [shape: f32[8,8,32], index: 2, kind: input, shape index: {}]
  %s3 = inlined_call_operand.hbm [shape: f32[8,8,32], index: 3, kind: output, shape index: {}]
  %s4 = sld [smem:[#allocation0]]
  $region65: #{tpu_custom_call.1} parent=0
    _
  %s6 = ssub.s32 1, %s4
  %s7 = scalar_select 0, %s6, %s4
  $region1: #{tpu_custom_call.1} parent=0
    #allocation5 [shape = 'u8[32768]{0}', space=vmem, size = 0x8000, scoped, tag = 'input window, operand 0']
    #allocation6 [shape = 's32[2]{0}', space=sflag, size = 0x8, scoped, tag = 'scoped memory for tpu_custom_call.1']
    #allocation7 [shape = 's32[2]{0}', space=sflag, size = 0x8, scoped, tag = 'scoped memory for tpu_custom_call.1']
    #allocation8 [shape = 'u8[32768]{0}', space=vmem, size = 0x8000, scoped, tag = 'input window, operand 1']
    #allocation9 [shape = 's32[2]{0}', space=sflag, size = 0x8, scoped, tag = 'scoped memory for tpu_custom_call.1']
    #allocation10 [shape = 'u8[32768]{0}', space=vmem, size = 0x8000, scoped, tag = 'input window, operand 2']
    #allocation11 [shape = 'u8[32768]{0}', space=vmem, size = 0x8000, scoped, tag = 'output window, operand 0']
    %8 = vsyncpa [#allocation6], 0
    %s9 = scalar_lea.sflag [#allocation6], 1
    %10 = vsyncpa %s9, 0
    %11 = vsyncpa [#allocation9], 0
    %s12 = scalar_lea.sflag [#allocation9], 1
    %13 = vsyncpa %s12, 0
    %14 = vsyncpa [#allocation7], 0
    %s15 = scalar_lea.sflag [#allocation7], 1
    %16 = vsyncpa %s15, 0
    loop: start=0, step=1, limit=4
    $region2: #{tpu_custom_call.1} parent=1 // loop_pre_header
      _
    $region3: #{tpu_custom_call.1} parent=1 // loop_header
      %s18 = sphi 0, %s22
      %p19 = scmp.ge.s32.totalorder %s18, 4
      %s25 = sphi 0, %s44
      %s26 = sphi 0, %s40
      %s27 = sphi 0, %s36
      %s28 = sphi 0, %s25
      %s29 = sphi 0, %s26
      %s30 = sphi 0, %s27
      %s31 = sphi 0, %s28
      %s32 = sphi 0, %s29
      %s33 = sphi 0, %s30
      %s49 = sphi 0, %s51
      %s52 = sphi 0, %s49
      %s53 = sphi 0, %s52
      %s69 = sphi 0, %s53
      %s77 = sphi 0, %s79
      %s80 = sphi 0, %s77
      %s81 = sphi 0, %s80
      %s97 = sphi 0, %s81
      %s105 = sphi 0, %s107
      %s108 = sphi 0, %s105
      %s109 = sphi 0, %s108
      %s125 = sphi 0, %s109
      %s133 = sphi 0, %s135
      %s136 = sphi 0, %s133
      %s137 = sphi 0, %s136
      %s153 = sphi 0, %s137
    $region4: #{tpu_custom_call.1} parent=1 // loop_header_branch
      %21 = sbr.rel (%p19) target = $region8
    $region5: #{tpu_custom_call.1} parent=1 // loop_body
      %s23 = ssub.s32 %s18, 1
      %s24 = ssub.s32 %s18, 2
      %s34 = sadd.s32 1, %s27
      %p35 = scmp.ge.s32.totalorder %s34, 1
      %s36 = scalar_select %p35, 0, %s34
      %s37 = sadd.s32 1, %s26
      %s38 = scalar_select %p35, %s37, %s26
      %p39 = scmp.ge.s32.totalorder %s38, 1
      %s40 = scalar_select %p39, 0, %s38
      %s41 = sadd.s32 1, %s25
      %s42 = scalar_select %p39, %s41, %s25
      %p43 = scmp.ge.s32.totalorder %s42, 2
      %s44 = scalar_select %p43, 0, %s42
      %s45 = ssub.s32 %s25, %s44
      %s46 = ssub.s32 %s26, %s40
      %s47 = sor.u32 %s45, %s46
      %p48 = scmp.eq.s32.totalorder %s47, 0
      %s50 = sadd.s32 %s49, 1
      %s51 = scalar_select %p48, %s49, %s50
      %p54 = pneg %p48
      %p55 = scmp.eq.s32.totalorder %s18, 1
      %p56 = por %p54, %p55
      %p57 = scmp.ne.s32.totalorder %s49, %s52
      %p58 = scmp.eq.s32.totalorder %s18, 0
      %p59 = por %p57, %p58
      %p60 = scmp.ne.s32.totalorder %s49, %s52
      %p61 = scmp.eq.s32.totalorder %s23, 1
      %p62 = por %p60, %p61
      %p63 = scmp.ne.s32.totalorder %s52, %s53
      %p64 = scmp.eq.s32.totalorder %s23, 0
      %p65 = por %p63, %p64
      %p66 = scmp.ne.s32.totalorder %s52, %s53
      %p67 = scmp.eq.s32.totalorder %s24, 1
      %p68 = por %p66, %p67
      %p70 = scmp.ne.s32.totalorder %s53, %s69
      %p71 = scmp.eq.s32.totalorder %s24, 0
      %p72 = por %p70, %p71
      %s73 = ssub.s32 %s25, %s44
      %s74 = ssub.s32 %s27, %s36
      %s75 = sor.u32 %s73, %s74
      %p76 = scmp.eq.s32.totalorder %s75, 0
      %s78 = sadd.s32 %s77, 1
      %s79 = scalar_select %p76, %s77, %s78
      %p82 = pneg %p76
      %p83 = scmp.eq.s32.totalorder %s18, 1
      %p84 = por %p82, %p83
      %p85 = scmp.ne.s32.totalorder %s77, %s80
      %p86 = scmp.eq.s32.totalorder %s18, 0
      %p87 = por %p85, %p86
      %p88 = scmp.ne.s32.totalorder %s77, %s80
      %p89 = scmp.eq.s32.totalorder %s23, 1
      %p90 = por %p88, %p89
      %p91 = scmp.ne.s32.totalorder %s80, %s81
      %p92 = scmp.eq.s32.totalorder %s23, 0
      %p93 = por %p91, %p92
      %p94 = scmp.ne.s32.totalorder %s80, %s81
      %p95 = scmp.eq.s32.totalorder %s24, 1
      %p96 = por %p94, %p95
      %p98 = scmp.ne.s32.totalorder %s81, %s97
      %p99 = scmp.eq.s32.totalorder %s24, 0
      %p100 = por %p98, %p99
      %s101 = ssub.s32 %s25, %s44
      %s102 = ssub.s32 %s27, %s36
      %s103 = sor.u32 %s101, %s102
      %p104 = scmp.eq.s32.totalorder %s103, 0
      %s106 = sadd.s32 %s105, 1
      %s107 = scalar_select %p104, %s105, %s106
      %p110 = pneg %p104
      %p111 = scmp.eq.s32.totalorder %s18, 1
      %p112 = por %p110, %p111
      %p113 = scmp.ne.s32.totalorder %s105, %s108
      %p114 = scmp.eq.s32.totalorder %s18, 0
      %p115 = por %p113, %p114
      %p116 = scmp.ne.s32.totalorder %s105, %s108
      %p117 = scmp.eq.s32.totalorder %s23, 1
      %p118 = por %p116, %p117
      %p119 = scmp.ne.s32.totalorder %s108, %s109
      %p120 = scmp.eq.s32.totalorder %s23, 0
      %p121 = por %p119, %p120
      %p122 = scmp.ne.s32.totalorder %s108, %s109
      %p123 = scmp.eq.s32.totalorder %s24, 1
      %p124 = por %p122, %p123
      %p126 = scmp.ne.s32.totalorder %s109, %s125
      %p127 = scmp.eq.s32.totalorder %s24, 0
      %p128 = por %p126, %p127
      %s129 = ssub.s32 %s25, %s44
      %s130 = ssub.s32 %s26, %s40
      %s131 = sor.u32 %s129, %s130
      %p132 = scmp.eq.s32.totalorder %s131, 0
      %s134 = sadd.s32 %s133, 1
      %s135 = scalar_select %p132, %s133, %s134
      %p138 = pneg %p132
      %p139 = scmp.eq.s32.totalorder %s18, 1
      %p140 = por %p138, %p139
      %p141 = scmp.ne.s32.totalorder %s133, %s136
      %p142 = scmp.eq.s32.totalorder %s18, 0
      %p143 = por %p141, %p142
      %p144 = scmp.ne.s32.totalorder %s133, %s136
      %p145 = scmp.eq.s32.totalorder %s23, 1
      %p146 = por %p144, %p145
      %p147 = scmp.ne.s32.totalorder %s136, %s137
      %p148 = scmp.eq.s32.totalorder %s23, 0
      %p149 = por %p147, %p148
      %p150 = scmp.ne.s32.totalorder %s136, %s137
      %p151 = scmp.eq.s32.totalorder %s24, 1
      %p152 = por %p150, %p151
      %p154 = scmp.ne.s32.totalorder %s137, %s153
      %p155 = scmp.eq.s32.totalorder %s24, 0
      %p156 = por %p154, %p155
      %p157 = scmp.le.s32.totalorder 1, %s18
      %p158 = scmp.lt.s32.totalorder %s18, 3
      %p159 = pnand %p157, %p158
      %p160 = pneg %p159
      // Predicated region
      $region9: #{tpu_custom_call.1} parent=5 // pred_check
        _
      $region10: #{tpu_custom_call.1} parent=5 // pred_check_branch
        %162 = sbr.rel (%p159) target = $region12
      $region11: #{tpu_custom_call.1} parent=5 // pred_region
        %s163 = ssub.s32 %s18, 1
      $region12: #{tpu_custom_call.1} parent=5 // pred_fallthru
        _
      %p164 = scmp.lt.s32.totalorder %s18, 2
      // Predicated region
      $region13: #{tpu_custom_call.1} parent=5 // pred_check
        %p165 = pneg %p164
      $region14: #{tpu_custom_call.1} parent=5 // pred_check_branch
        %167 = sbr.rel (%p165) target = $region16
      $region15: #{tpu_custom_call.1} parent=5 // pred_region
        // Predicated region
        $region17: #{tpu_custom_call.1} parent=15 // pred_check
          %p168 = pneg %p59
        $region18: #{tpu_custom_call.1} parent=15 // pred_check_branch
          %170 = sbr.rel (%p168) target = $region20
        $region19: #{tpu_custom_call.1} parent=15 // pred_region
          %s171 = sand.u32 %s49, 1
          %s172 = scalar_lea.sflag [#allocation6], %s171
          %s173 = sand.u32 %s49, 1
          %s174 = smul.addr %s173, 32
          %s175 = scalar_lea.vmem [#allocation5], %s174
          %s176 = smul.u32 4, %s25
          %178 = vsyncadd %s172, 0
          %s179 = sadd.s32 %s26, %s176
          %s180 = smul.addr %s179, 8
          %s181 = scalar_lea.hbm %s0, %s180
          %s182 = sshll.u32 %s181, 4
          %s183 = int_to_ptr.hbm [resolvable:$true] %s182
          %s184 = sshll.u32 %s175, 4
          %s185 = int_to_ptr.vmem [resolvable:$true] %s184
          %190 = dma.hbm_to_vmem [thread:$0]  %s183, 512, %s185, %s172, 128, 128, 8
        $region20: #{tpu_custom_call.1} parent=15 // pred_fallthru
          _
        // Predicated region
        $region21: #{tpu_custom_call.1} parent=15 // pred_check
          %p191 = pneg %p87
        $region22: #{tpu_custom_call.1} parent=15 // pred_check_branch
          %193 = sbr.rel (%p191) target = $region24
        $region23: #{tpu_custom_call.1} parent=15 // pred_region
          %s194 = sand.u32 %s18, 1
          %s195 = scalar_lea.sflag [#allocation9], %s194
          %s196 = sand.u32 %s77, 1
          %s197 = smul.addr %s196, 32
          %s198 = scalar_lea.vmem [#allocation8], %s197
          %s199 = smul.u32 4, %s25
          %201 = vsyncadd %s195, 0
          %s202 = sadd.s32 %s27, %s199
          %s203 = smul.addr %s202, 8
          %s204 = scalar_lea.hbm %s1, %s203
          %s205 = sshll.u32 %s204, 4
          %s206 = int_to_ptr.hbm [resolvable:$true] %s205
          %s207 = sshll.u32 %s198, 4
          %s208 = int_to_ptr.vmem [resolvable:$true] %s207
          %213 = dma.hbm_to_vmem [thread:$0]  %s206, 512, %s208, %s195, 128, 128, 8
        $region24: #{tpu_custom_call.1} parent=15 // pred_fallthru
          _
        // Predicated region
        $region25: #{tpu_custom_call.1} parent=15 // pred_check
          %p214 = pneg %p115
        $region26: #{tpu_custom_call.1} parent=15 // pred_check_branch
          %216 = sbr.rel (%p214) target = $region28
        $region27: #{tpu_custom_call.1} parent=15 // pred_region
          %s217 = sand.u32 %s18, 1
          %s218 = scalar_lea.sflag [#allocation9], %s217
          %s219 = sand.u32 %s105, 1
          %s220 = smul.addr %s219, 32
          %s221 = scalar_lea.vmem [#allocation10], %s220
          %s222 = smul.u32 4, %s25
          %224 = vsyncadd %s218, 0
          %s225 = sadd.s32 %s27, %s222
          %s226 = smul.addr %s225, 8
          %s227 = scalar_lea.hbm %s2, %s226
          %s228 = sshll.u32 %s227, 4
          %s229 = int_to_ptr.hbm [resolvable:$true] %s228
          %s230 = sshll.u32 %s221, 4
          %s231 = int_to_ptr.vmem [resolvable:$true] %s230
          %236 = dma.hbm_to_vmem [thread:$0]  %s229, 512, %s231, %s218, 128, 128, 8
        $region28: #{tpu_custom_call.1} parent=15 // pred_fallthru
          _
      $region16: #{tpu_custom_call.1} parent=5 // pred_fallthru
        _
      %p237 = scmp.le.s32.totalorder 1, %s18
      %p238 = scmp.lt.s32.totalorder %s18, 3
      %p239 = pnand %p237, %p238
      %p240 = pneg %p239
      // Predicated region
      $region29: #{tpu_custom_call.1} parent=5 // pred_check
        _
      $region30: #{tpu_custom_call.1} parent=5 // pred_check_branch
        %242 = sbr.rel (%p239) target = $region32
      $region31: #{tpu_custom_call.1} parent=5 // pred_region
        %s243 = ssub.s32 %s18, 1
        %s244 = sand.u32 %s52, 1
        %s245 = scalar_lea.sflag [#allocation6], %s244
        %s246 = sand.u32 %s52, 1
        %s247 = smul.addr %s246, 32
        %s248 = scalar_lea.vmem [#allocation5], %s247
        // Predicated region
        $region33: #{tpu_custom_call.1} parent=31 // pred_check
          %p249 = pneg %p65
        $region34: #{tpu_custom_call.1} parent=31 // pred_check_branch
          %251 = sbr.rel (%p249) target = $region36
        $region35: #{tpu_custom_call.1} parent=31 // pred_region
          %253 = dma.done %s245, 512
        $region36: #{tpu_custom_call.1} parent=31 // pred_fallthru
          _
        %s254 = sand.u32 %s23, 1
        %s255 = scalar_lea.sflag [#allocation9], %s254
        %s256 = sand.u32 %s80, 1
        %s257 = smul.addr %s256, 32
        %s258 = scalar_lea.vmem [#allocation8], %s257
        // Predicated region
        $region37: #{tpu_custom_call.1} parent=31 // pred_check
          %p259 = pneg %p93
        $region38: #{tpu_custom_call.1} parent=31 // pred_check_branch
          %261 = sbr.rel (%p259) target = $region40
        $region39: #{tpu_custom_call.1} parent=31 // pred_region
          %263 = dma.done %s255, 512
        $region40: #{tpu_custom_call.1} parent=31 // pred_fallthru
          _
        %s264 = sand.u32 %s23, 1
        %s265 = scalar_lea.sflag [#allocation9], %s264
        %s266 = sand.u32 %s108, 1
        %s267 = smul.addr %s266, 32
        %s268 = scalar_lea.vmem [#allocation10], %s267
        // Predicated region
        $region41: #{tpu_custom_call.1} parent=31 // pred_check
          %p269 = pneg %p121
        $region42: #{tpu_custom_call.1} parent=31 // pred_check_branch
          %271 = sbr.rel (%p269) target = $region44
        $region43: #{tpu_custom_call.1} parent=31 // pred_region
          %273 = dma.done %s265, 512
        $region44: #{tpu_custom_call.1} parent=31 // pred_fallthru
          _
        %s274 = sand.u32 %s52, 1
        %s275 = scalar_lea.sflag [#allocation6], %s274
        %s276 = sand.u32 %s52, 1
        %s277 = smul.addr %s276, 32
        %s278 = scalar_lea.vmem [#allocation5], %s277
        %p279 = pneg %p65
        %p280 = pneg %p62
        %s281 = sand.u32 %s23, 1
        %s282 = scalar_lea.sflag [#allocation9], %s281
        %s283 = sand.u32 %s80, 1
        %s284 = smul.addr %s283, 32
        %s285 = scalar_lea.vmem [#allocation8], %s284
        %p286 = pneg %p93
        %p287 = pneg %p90
        %s288 = sand.u32 %s23, 1
        %s289 = scalar_lea.sflag [#allocation9], %s288
        %s290 = sand.u32 %s108, 1
        %s291 = smul.addr %s290, 32
        %s292 = scalar_lea.vmem [#allocation10], %s291
        %p293 = pneg %p121
        %p294 = pneg %p118
        %p295 = pneg %p149
        %p296 = pneg %p146
        %s297 = sand.u32 %s136, 1
        %s298 = scalar_lea.sflag [#allocation7], %s297
        %s299 = sand.u32 %s136, 1
        %s300 = smul.addr %s299, 32
        %s301 = scalar_lea.vmem [#allocation11], %s300
        %s302 = smul.u32 4, %s28
        %s303 = smul.u32 4, %s28
        %s304 = smul.u32 4, %s28
        %s305 = smul.u32 4, %s28
        %p307 = scmp.eq.s32.totalorder %s30, 0
        // Predicated region
        $region45: #{tpu_custom_call.1} parent=31 // pred_check
          %p308 = pneg %p307
        $region46: #{tpu_custom_call.1} parent=31 // pred_check_branch
          %310 = sbr.rel (%p308) target = $region48
        $region47: #{tpu_custom_call.1} parent=31 // pred_region
          %vm311 = vcmask 7168
          %312 = vst.msk [vmem:[#allocation2] sm:$0xff] %vm311, -inf
          %313 = vst.msk [vmem:[#allocation2 + $0x8] sm:$0xff] %vm311, -inf
          %314 = vst.msk [vmem:[#allocation2 + $0x10] sm:$0xff] %vm311, -inf
          %315 = vst.msk [vmem:[#allocation2 + $0x18] sm:$0xff] %vm311, -inf
          %316 = vst.msk [vmem:[#allocation3] sm:$0xff] %vm311, 0.0
          %317 = vst.msk [vmem:[#allocation3 + $0x8] sm:$0xff] %vm311, 0.0
          %318 = vst.msk [vmem:[#allocation3 + $0x10] sm:$0xff] %vm311, 0.0
          %319 = vst.msk [vmem:[#allocation3 + $0x18] sm:$0xff] %vm311, 0.0
          %vm320 = vcmask 261120
          %321 = vst.msk [vmem:[#allocation4] sm:$0xff] %vm320, 0.0
          %322 = vst.msk [vmem:[#allocation4 + $0x8] sm:$0xff] %vm320, 0.0
          %323 = vst.msk [vmem:[#allocation4 + $0x10] sm:$0xff] %vm320, 0.0
          %324 = vst.msk [vmem:[#allocation4 + $0x18] sm:$0xff] %vm320, 0.0
        $region48: #{tpu_custom_call.1} parent=31 // pred_fallthru
          _
        %v325 = vld [vmem:[%s248] sm:$0xff]
        %v326 = vld [vmem:[%s248 + $0x8] sm:$0xff]
        %v327 = vld [vmem:[%s248 + $0x10] sm:$0xff]
        %v328 = vld [vmem:[%s248 + $0x18] sm:$0xff]
        %v329 = vmul.f32 %v325, 0.25503486
        %v330 = vmul.f32 %v326, 0.25503486
        %v331 = vmul.f32 %v327, 0.25503486
        %v332 = vmul.f32 %v328, 0.25503486
        %v333 = vpack.c.bf16 %v329, %v329
        %v334 = vpack.c.bf16 %v330, %v330
        %v335 = vpack.c.bf16 %v331, %v331
        %v336 = vpack.c.bf16 %v332, %v332
        %v337 = vld [vmem:[%s258] sm:$0xff]
        %v338 = vld [vmem:[%s258 + $0x8] sm:$0xff]
        %v339 = vld [vmem:[%s258 + $0x10] sm:$0xff]
        %v340 = vld [vmem:[%s258 + $0x18] sm:$0xff]
        %v341 = vpack.c.bf16 %v337, %v337
        %v342 = vpack.c.bf16 %v338, %v338
        %v343 = vpack.c.bf16 %v339, %v339
        %v344 = vpack.c.bf16 %v340, %v340
        %v345 = vld [vmem:[%s268] sm:$0xff]
        %v346 = vld [vmem:[%s268 + $0x8] sm:$0xff]
        %v347 = vld [vmem:[%s268 + $0x10] sm:$0xff]
        %v348 = vld [vmem:[%s268 + $0x18] sm:$0xff]
        %v349 = vpack.c.bf16 %v345, %v345
        %v350 = vpack.c.bf16 %v346, %v346
        %v351 = vpack.c.bf16 %v347, %v347
        %v352 = vpack.c.bf16 %v348, %v348
        %vm353 = vcmask 261120
        %v355 = vsel %vm353, %v333, 0
        %v358 = vsel %vm353, %v341, 0
        %360 = vmatpush.bf16.xpose.msra.mxu0 0
        %361 = vmatpush.bf16.xpose.msra.mxu0 0
        %362 = vmatpush.bf16.xpose.msra.mxu0 0
        %363 = vmatpush.bf16.xpose.msra.mxu0 0
        %364 = vmatpush.bf16.xpose.msra.mxu0 0
        %365 = vmatpush.bf16.xpose.msra.mxu0 0
        %366 = vmatpush.bf16.xpose.msra.mxu0 0
        %367 = vmatpush.bf16.xpose.msra.mxu0 %v358
        %368 = vmatmul.bf16.gmra.mxu0 %v355
        %v369 = vpop.f32.mrf.mxu0
        %v370 = vadd.f32 0.0, %v369
        %v371 = vpop.f32.mrf.mxu0
        %372 = vdwg.mxu0
        %v374 = vsel %vm353, %v334, 0
        %v377 = vsel %vm353, %v342, 0
        %379 = vmatpush.bf16.xpose.msra.mxu0 0
        %380 = vmatpush.bf16.xpose.msra.mxu0 0
        %381 = vmatpush.bf16.xpose.msra.mxu0 0
        %382 = vmatpush.bf16.xpose.msra.mxu0 0
        %383 = vmatpush.bf16.xpose.msra.mxu0 0
        %384 = vmatpush.bf16.xpose.msra.mxu0 0
        %385 = vmatpush.bf16.xpose.msra.mxu0 0
        %386 = vmatpush.bf16.xpose.msra.mxu0 %v377
        %387 = vmatmul.bf16.gmra.mxu0 %v374
        %v388 = vpop.f32.mrf.mxu0
        %v389 = vadd.f32 0.0, %v388
        %v390 = vpop.f32.mrf.mxu0
        %391 = vdwg.mxu0
        %v393 = vsel %vm353, %v335, 0
        %v396 = vsel %vm353, %v343, 0
        %398 = vmatpush.bf16.xpose.msra.mxu0 0
        %399 = vmatpush.bf16.xpose.msra.mxu0 0
        %400 = vmatpush.bf16.xpose.msra.mxu0 0
        %401 = vmatpush.bf16.xpose.msra.mxu0 0
        %402 = vmatpush.bf16.xpose.msra.mxu0 0
        %403 = vmatpush.bf16.xpose.msra.mxu0 0
        %404 = vmatpush.bf16.xpose.msra.mxu0 0
        %405 = vmatpush.bf16.xpose.msra.mxu0 %v396
        %406 = vmatmul.bf16.gmra.mxu0 %v393
        %v407 = vpop.f32.mrf.mxu0
        %v408 = vadd.f32 0.0, %v407
        %v409 = vpop.f32.mrf.mxu0
        %410 = vdwg.mxu0
        %v412 = vsel %vm353, %v336, 0
        %v415 = vsel %vm353, %v344, 0
        %417 = vmatpush.bf16.xpose.msra.mxu0 0
        %418 = vmatpush.bf16.xpose.msra.mxu0 0
        %419 = vmatpush.bf16.xpose.msra.mxu0 0
        %420 = vmatpush.bf16.xpose.msra.mxu0 0
        %421 = vmatpush.bf16.xpose.msra.mxu0 0
        %422 = vmatpush.bf16.xpose.msra.mxu0 0
        %423 = vmatpush.bf16.xpose.msra.mxu0 0
        %424 = vmatpush.bf16.xpose.msra.mxu0 %v415
        %425 = vmatmul.bf16.gmra.mxu0 %v412
        %v426 = vpop.f32.mrf.mxu0
        %v427 = vadd.f32 0.0, %v426
        %v428 = vpop.f32.mrf.mxu0
        %429 = vdwg.mxu0
        %v430 = vld [vmem:[#allocation2] sm:$0xff]
        %v431 = vld [vmem:[#allocation2 + $0x8] sm:$0xff]
        %v432 = vld [vmem:[#allocation2 + $0x10] sm:$0xff]
        %v433 = vld [vmem:[#allocation2 + $0x18] sm:$0xff]
        %vm434 = vcmask 64512
        %v435 = vsel %vm434, %v370, -inf
        %436 = vmax.xlane.f32.xlu0 %v435
        %v437 = vpop.xlane.xlu0 %436
        %v438 = vsel %vm434, %v389, -inf
        %439 = vmax.xlane.f32.xlu0 %v438
        %v440 = vpop.xlane.xlu0 %439
        %v441 = vsel %vm434, %v408, -inf
        %442 = vmax.xlane.f32.xlu0 %v441
        %v443 = vpop.xlane.xlu0 %442
        %v444 = vsel %vm434, %v427, -inf
        %445 = vmax.xlane.f32.xlu0 %v444
        %v446 = vpop.xlane.xlu0 %445
        %v447 = vmax.f32 %v430, %v437
        %v448 = vmax.f32 %v431, %v440
        %v449 = vmax.f32 %v432, %v443
        %v450 = vmax.f32 %v433, %v446
        %v451 = vsub.f32 %v430, %v447
        %v452 = vsub.f32 %v431, %v448
        %v453 = vsub.f32 %v432, %v449
        %v454 = vsub.f32 %v433, %v450
        %v455 = vpow.pop %v451
        %v456 = vpow.pop %v452
        %v457 = vpow.pop %v453
        %v458 = vpow.pop %v454
        %460 = vset.pattern.permute.xlu0 0
        %461 = vperm.xlu0 %460, %v447
        %v462 = vpop.permute.xlu0 %461
        %465 = vset.pattern.permute.xlu0 0
        %466 = vperm.xlu0 %465, %v448
        %v467 = vpop.permute.xlu0 %466
        %470 = vset.pattern.permute.xlu0 0
        %471 = vperm.xlu0 %470, %v449
        %v472 = vpop.permute.xlu0 %471
        %475 = vset.pattern.permute.xlu0 0
        %476 = vperm.xlu0 %475, %v450
        %v477 = vpop.permute.xlu0 %476
        %v479 = vsub.f32 %v370, %v462
        %v480 = vsub.f32 %v389, %v467
        %v481 = vsub.f32 %v408, %v472
        %v482 = vsub.f32 %v427, %v477
        %v483 = vpow.pop %v479
        %v484 = vpow.pop %v480
        %v485 = vpow.pop %v481
        %v486 = vpow.pop %v482
        %v487 = vld [vmem:[#allocation3] sm:$0xff]
        %v488 = vld [vmem:[#allocation3 + $0x8] sm:$0xff]
        %v489 = vld [vmem:[#allocation3 + $0x10] sm:$0xff]
        %v490 = vld [vmem:[#allocation3 + $0x18] sm:$0xff]
        %v491 = vmul.f32 %v455, %v487
        %v492 = vmul.f32 %v456, %v488
        %v493 = vmul.f32 %v457, %v489
        %v494 = vmul.f32 %v458, %v490
        %v495 = vsel %vm434, %v483, 0.0
        %496 = vadd.xlane.f32.xlu0 %v495
        %v497 = vpop.xlane.xlu0 %496
        %v498 = vsel %vm434, %v484, 0.0
        %499 = vadd.xlane.f32.xlu0 %v498
        %v500 = vpop.xlane.xlu0 %499
        %v501 = vsel %vm434, %v485, 0.0
        %502 = vadd.xlane.f32.xlu0 %v501
        %v503 = vpop.xlane.xlu0 %502
        %v504 = vsel %vm434, %v486, 0.0
        %505 = vadd.xlane.f32.xlu0 %v504
        %v506 = vpop.xlane.xlu0 %505
        %v507 = vadd.f32 %v491, %v497
        %v508 = vadd.f32 %v492, %v500
        %v509 = vadd.f32 %v493, %v503
        %v510 = vadd.f32 %v494, %v506
        %vm511 = vcmask 7168
        %512 = vst.msk [vmem:[#allocation3] sm:$0xff] %vm511, %v507
        %513 = vst.msk [vmem:[#allocation3 + $0x8] sm:$0xff] %vm511, %v508
        %514 = vst.msk [vmem:[#allocation3 + $0x10] sm:$0xff] %vm511, %v509
        %515 = vst.msk [vmem:[#allocation3 + $0x18] sm:$0xff] %vm511, %v510
        %v516 = vld [vmem:[#allocation4] sm:$0xff]
        %v517 = vld [vmem:[#allocation4 + $0x8] sm:$0xff]
        %v518 = vld [vmem:[#allocation4 + $0x10] sm:$0xff]
        %v519 = vld [vmem:[#allocation4 + $0x18] sm:$0xff]
        %521 = vset.pattern.permute.xlu0 0
        %522 = vperm.xlu0 %521, %v455
        %v523 = vpop.permute.xlu0 %522
        %526 = vset.pattern.permute.xlu0 0
        %527 = vperm.xlu0 %526, %v456
        %v528 = vpop.permute.xlu0 %527
        %531 = vset.pattern.permute.xlu0 0
        %532 = vperm.xlu0 %531, %v457
        %v533 = vpop.permute.xlu0 %532
        %536 = vset.pattern.permute.xlu0 0
        %537 = vperm.xlu0 %536, %v458
        %v538 = vpop.permute.xlu0 %537
        %v540 = vmul.f32 %v523, %v516
        %v541 = vmul.f32 %v528, %v517
        %v542 = vmul.f32 %v533, %v518
        %v543 = vmul.f32 %v538, %v519
        %v544 = vpack.c.bf16 %v483, %v483
        %v545 = vpack.c.bf16 %v484, %v484
        %v546 = vpack.c.bf16 %v485, %v485
        %v547 = vpack.c.bf16 %v486, %v486
        %v549 = vsel %vm434, %v544, 0
        %vm551 = vcmask 1043456
        %v553 = vsel %vm551, %v349, 0
        %555 = vmatpush.bf16.msra.mxu0 0
        %556 = vmatpush.bf16.msra.mxu0 0
        %557 = vmatpush.bf16.msra.mxu0 0
        %558 = vmatpush.bf16.msra.mxu0 0
        %559 = vmatpush.bf16.msra.mxu0 0
        %560 = vmatpush.bf16.msra.mxu0 0
        %561 = vmatpush.bf16.msra.mxu0 0
        %562 = vmatpush.bf16.msra.mxu0 %v553
        %563 = vmatmul.bf16.gmra.mxu0 %v549
        %v564 = vpop.f32.mrf.mxu0
        %v565 = vadd.f32 0.0, %v564
        %v566 = vpop.f32.mrf.mxu0
        %567 = vdwg.mxu0
        %v569 = vsel %vm434, %v545, 0
        %v572 = vsel %vm551, %v350, 0
        %574 = vmatpush.bf16.msra.mxu0 0
        %575 = vmatpush.bf16.msra.mxu0 0
        %576 = vmatpush.bf16.msra.mxu0 0
        %577 = vmatpush.bf16.msra.mxu0 0
        %578 = vmatpush.bf16.msra.mxu0 0
        %579 = vmatpush.bf16.msra.mxu0 0
        %580 = vmatpush.bf16.msra.mxu0 0
        %581 = vmatpush.bf16.msra.mxu0 %v572
        %582 = vmatmul.bf16.gmra.mxu0 %v569
        %v583 = vpop.f32.mrf.mxu0
        %v584 = vadd.f32 0.0, %v583
        %v585 = vpop.f32.mrf.mxu0
        %586 = vdwg.mxu0
        %v588 = vsel %vm434, %v546, 0
        %v591 = vsel %vm551, %v351, 0
        %593 = vmatpush.bf16.msra.mxu0 0
        %594 = vmatpush.bf16.msra.mxu0 0
        %595 = vmatpush.bf16.msra.mxu0 0
        %596 = vmatpush.bf16.msra.mxu0 0
        %597 = vmatpush.bf16.msra.mxu0 0
        %598 = vmatpush.bf16.msra.mxu0 0
        %599 = vmatpush.bf16.msra.mxu0 0
        %600 = vmatpush.bf16.msra.mxu0 %v591
        %601 = vmatmul.bf16.gmra.mxu0 %v588
        %v602 = vpop.f32.mrf.mxu0
        %v603 = vadd.f32 0.0, %v602
        %v604 = vpop.f32.mrf.mxu0
        %605 = vdwg.mxu0
        %v607 = vsel %vm434, %v547, 0
        %v610 = vsel %vm551, %v352, 0
        %612 = vmatpush.bf16.msra.mxu0 0
        %613 = vmatpush.bf16.msra.mxu0 0
        %614 = vmatpush.bf16.msra.mxu0 0
        %615 = vmatpush.bf16.msra.mxu0 0
        %616 = vmatpush.bf16.msra.mxu0 0
        %617 = vmatpush.bf16.msra.mxu0 0
        %618 = vmatpush.bf16.msra.mxu0 0
        %619 = vmatpush.bf16.msra.mxu0 %v610
        %620 = vmatmul.bf16.gmra.mxu0 %v607
        %v621 = vpop.f32.mrf.mxu0
        %v622 = vadd.f32 0.0, %v621
        %v623 = vpop.f32.mrf.mxu0
        %624 = vdwg.mxu0
        %v625 = vadd.f32 %v540, %v565
        %v626 = vadd.f32 %v541, %v584
        %v627 = vadd.f32 %v542, %v603
        %v628 = vadd.f32 %v543, %v622
        %629 = vst.msk [vmem:[#allocation4] sm:$0xff] %vm353, %v625
        %630 = vst.msk [vmem:[#allocation4 + $0x8] sm:$0xff] %vm353, %v626
        %631 = vst.msk [vmem:[#allocation4 + $0x10] sm:$0xff] %vm353, %v627
        %632 = vst.msk [vmem:[#allocation4 + $0x18] sm:$0xff] %vm353, %v628
        %633 = vst.msk [vmem:[#allocation2] sm:$0xff] %vm511, %v447
        %634 = vst.msk [vmem:[#allocation2 + $0x8] sm:$0xff] %vm511, %v448
        %635 = vst.msk [vmem:[#allocation2 + $0x10] sm:$0xff] %vm511, %v449
        %636 = vst.msk [vmem:[#allocation2 + $0x18] sm:$0xff] %vm511, %v450
        // Predicated region
        $region49: #{tpu_custom_call.1} parent=31 // pred_check
          %p637 = pneg %p307
        $region50: #{tpu_custom_call.1} parent=31 // pred_check_branch
          %639 = sbr.rel (%p637) target = $region52
        $region51: #{tpu_custom_call.1} parent=31 // pred_region
          %v640 = vld [vmem:[#allocation4] sm:$0xff]
          %v641 = vld [vmem:[#allocation4 + $0x8] sm:$0xff]
          %v642 = vld [vmem:[#allocation4 + $0x10] sm:$0xff]
          %v643 = vld [vmem:[#allocation4 + $0x18] sm:$0xff]
          %v644 = vld [vmem:[#allocation3] sm:$0xff]
          %v645 = vld [vmem:[#allocation3 + $0x8] sm:$0xff]
          %v646 = vld [vmem:[#allocation3 + $0x10] sm:$0xff]
          %v647 = vld [vmem:[#allocation3 + $0x18] sm:$0xff]
          %649 = vset.pattern.permute.xlu0 0
          %650 = vperm.xlu0 %649, %v644
          %v651 = vpop.permute.xlu0 %650
          %654 = vset.pattern.permute.xlu0 0
          %655 = vperm.xlu0 %654, %v645
          %v656 = vpop.permute.xlu0 %655
          %659 = vset.pattern.permute.xlu0 0
          %660 = vperm.xlu0 %659, %v646
          %v661 = vpop.permute.xlu0 %660
          %664 = vset.pattern.permute.xlu0 0
          %665 = vperm.xlu0 %664, %v647
          %v666 = vpop.permute.xlu0 %665
          %v668 = vrcp.pop %v651
          %v669 = vmul.f32 %v651, %v668
          %v670 = vsub.f32 1.0, %v669
          %v671 = vmul.f32 %v668, %v670
          %v672 = vadd.f32 %v668, %v671
          %vm673 = vweird.f32 %v651
          %vm674 = vweird.f32 %v668
          %vm675 = vmor %vm673, %vm674
          %v676 = vsel %vm675, %v668, %v672
          %v677 = vand.u32 2147483647, %v651
          %vm678 = vcmp.eq.f32.partialorder %v677, 8.507059e+37
          %v679 = vand.u32 %v651, 2147483648
          %v680 = vor.u32 1.1754944e-38, %v679
          %v681 = vsel %vm678, %v680, %v676
          %v682 = vmul.f32 %v640, %v681
          %v683 = vrcp.pop %v656
          %v684 = vmul.f32 %v656, %v683
          %v685 = vsub.f32 1.0, %v684
          %v686 = vmul.f32 %v683, %v685
          %v687 = vadd.f32 %v683, %v686
          %vm688 = vweird.f32 %v656
          %vm689 = vweird.f32 %v683
          %vm690 = vmor %vm688, %vm689
          %v691 = vsel %vm690, %v683, %v687
          %v692 = vand.u32 2147483647, %v656
          %vm693 = vcmp.eq.f32.partialorder %v692, 8.507059e+37
          %v694 = vand.u32 %v656, 2147483648
          %v695 = vor.u32 1.1754944e-38, %v694
          %v696 = vsel %vm693, %v695, %v691
          %v697 = vmul.f32 %v641, %v696
          %v698 = vrcp.pop %v661
          %v699 = vmul.f32 %v661, %v698
          %v700 = vsub.f32 1.0, %v699
          %v701 = vmul.f32 %v698, %v700
          %v702 = vadd.f32 %v698, %v701
          %vm703 = vweird.f32 %v661
          %vm704 = vweird.f32 %v698
          %vm705 = vmor %vm703, %vm704
          %v706 = vsel %vm705, %v698, %v702
          %v707 = vand.u32 2147483647, %v661
          %vm708 = vcmp.eq.f32.partialorder %v707, 8.507059e+37
          %v709 = vand.u32 %v661, 2147483648
          %v710 = vor.u32 1.1754944e-38, %v709
          %v711 = vsel %vm708, %v710, %v706
          %v712 = vmul.f32 %v642, %v711
          %v713 = vrcp.pop %v666
          %v714 = vmul.f32 %v666, %v713
          %v715 = vsub.f32 1.0, %v714
          %v716 = vmul.f32 %v713, %v715
          %v717 = vadd.f32 %v713, %v716
          %vm718 = vweird.f32 %v666
          %vm719 = vweird.f32 %v713
          %vm720 = vmor %vm718, %vm719
          %v721 = vsel %vm720, %v713, %v717
          %v722 = vand.u32 2147483647, %v666
          %vm723 = vcmp.eq.f32.partialorder %v722, 8.507059e+37
          %v724 = vand.u32 %v666, 2147483648
          %v725 = vor.u32 1.1754944e-38, %v724
          %v726 = vsel %vm723, %v725, %v721
          %v727 = vmul.f32 %v643, %v726
          %728 = vst.msk [vmem:[%s301] sm:$0xff] %vm353, %v682
          %729 = vst.msk [vmem:[%s301 + $0x8] sm:$0xff] %vm353, %v697
          %730 = vst.msk [vmem:[%s301 + $0x10] sm:$0xff] %vm353, %v712
          %731 = vst.msk [vmem:[%s301 + $0x18] sm:$0xff] %vm353, %v727
        $region52: #{tpu_custom_call.1} parent=31 // pred_fallthru
          _
        %s732 = sand.u32 %s136, 1
        %s733 = scalar_lea.sflag [#allocation7], %s732
        %s734 = sand.u32 %s136, 1
        %s735 = smul.addr %s734, 32
        %s736 = scalar_lea.vmem [#allocation11], %s735
        // Predicated region
        $region53: #{tpu_custom_call.1} parent=31 // pred_check
          %p737 = pneg %p146
        $region54: #{tpu_custom_call.1} parent=31 // pred_check_branch
          %739 = sbr.rel (%p737) target = $region56
        $region55: #{tpu_custom_call.1} parent=31 // pred_region
          %s740 = smul.u32 4, %s28
          %742 = vsyncadd %s733, 0
          %s743 = sadd.s32 %s29, %s740
          %s744 = smul.addr %s743, 8
          %s745 = scalar_lea.hbm %s3, %s744
          %s746 = sshll.u32 %s736, 4
          %s747 = int_to_ptr.vmem [resolvable:$true] %s746
          %s748 = sshll.u32 %s745, 4
          %s749 = int_to_ptr.hbm [resolvable:$true] %s748
          %754 = dma.vmem_to_hbm [thread:$0]  %s747, 512, %s749, %s733, 128, 128, 8
        $region56: #{tpu_custom_call.1} parent=31 // pred_fallthru
          _
      $region32: #{tpu_custom_call.1} parent=5 // pred_fallthru
        _
      %p755 = scmp.le.s32.totalorder 2, %s18
      // Predicated region
      $region57: #{tpu_custom_call.1} parent=5 // pred_check
        %p756 = pneg %p755
      $region58: #{tpu_custom_call.1} parent=5 // pred_check_branch
        %758 = sbr.rel (%p756) target = $region60
      $region59: #{tpu_custom_call.1} parent=5 // pred_region
        %s759 = ssub.s32 %s18, 2
        // Predicated region
        $region61: #{tpu_custom_call.1} parent=59 // pred_check
          %p760 = pneg %p152
        $region62: #{tpu_custom_call.1} parent=59 // pred_check_branch
          %762 = sbr.rel (%p760) target = $region64
        $region63: #{tpu_custom_call.1} parent=59 // pred_region
          %s763 = sand.u32 %s137, 1
          %s764 = scalar_lea.sflag [#allocation7], %s763
          %s765 = sand.u32 %s137, 1
          %s766 = smul.addr %s765, 32
          %s767 = scalar_lea.vmem [#allocation11], %s766
          %769 = dma.done %s764, 512
        $region64: #{tpu_custom_call.1} parent=59 // pred_fallthru
          _
      $region60: #{tpu_custom_call.1} parent=5 // pred_fallthru
        _
    $region6: #{tpu_custom_call.1} parent=1 // loop_footer
      %s22 = sadd.s32 1, %s18
    $region7: #{tpu_custom_call.1} parent=1 // loop_footer_branch
      %17 = sbr.rel target = $region3
    $region8: #{tpu_custom_call.1} parent=1 // loop_exit
      _
    %770 = vsyncpa [#allocation6], 1
    %s771 = scalar_lea.sflag [#allocation6], 1
    %772 = vsyncpa %s771, 1
    %773 = vsyncpa [#allocation9], 1
    %s774 = scalar_lea.sflag [#allocation9], 1
    %775 = vsyncpa %s774, 1
    %776 = vsyncpa [#allocation7], 1
    %s777 = scalar_lea.sflag [#allocation7], 1
    %778 = vsyncpa %s777, 1

</llo_original>
